<compile_context>
chip_gen: v7x
topology: tpu7x:2x2x1
jax: 0.10.0
libtpu: 0.0.40
codegen_flags: <defaults>
</compile_context>

<pallas_src>
from functools import partial

import jax
import jax.numpy as jnp
from jax.experimental import pallas as pl
from jax.experimental.pallas import tpu as pltpu

# ----------------------------- configuration --------------------------------
D_MODEL = 128         # d_model (lane-dense: multiple of 128)
BOTTLENECK = 64       # bottleneck (down_size)
SCALE = 0.1           # adapter_scalar='0.1' -> fixed float scale


# ------------------------------- kernel -------------------------------------
def adapter_kernel(x_ref, wd_ref, bd_ref, wu_ref, bu_ref, out_ref):
    # x_ref: (TM, C) rows of the flattened (B*N, C) input, resident in VMEM.
    x = x_ref[...]                                                    # (TM, C)

    # down projection + ReLU  (Dropout is identity in eval / p=0.0)
    down = jnp.dot(x, wd_ref[...], preferred_element_type=jnp.float32) + bd_ref[...]
    down = jnp.maximum(down, 0.0)

    # up projection, fixed scale, residual add
    up = jnp.dot(down, wu_ref[...], preferred_element_type=jnp.float32) + bu_ref[...]
    out_ref[...] = up * SCALE + x


# ------------------------------- wrapper -------------------------------------
@partial(jax.jit, static_argnames=())
def adapter_forward(x, params):
    """x: (B, N, C) float32. params weights stored as (in, out) so x @ W
    matches PyTorch's x @ W.T."""
    B, N, C = x.shape
    rows = B * N

    # Fold batch*seq into one lane-dense slab; 2 parallel grid steps if the
    # rows split cleanly into sublane-aligned halves (keeps both v7x TCs busy),
    # otherwise a single step (still fine on v5e/v6e with 1 TC).
    grid_len = 2 if (rows % 2 == 0 and (rows // 2) % 8 == 0) else 1
    tm = rows // grid_len

    x2 = x.reshape(rows, C)

    const2d = lambda i: (0, 0)

    grid_spec = pltpu.PrefetchScalarGridSpec(
        num_scalar_prefetch=0,
        grid=(grid_len,),
        in_specs=[
            pl.BlockSpec((tm, C), lambda i: (i, 0)),          # x rows
            pl.BlockSpec((C, BOTTLENECK), const2d),           # Wd (in, out)
            pl.BlockSpec((1, BOTTLENECK), const2d),           # bd
            pl.BlockSpec((BOTTLENECK, C), const2d),           # Wu (in, out)
            pl.BlockSpec((1, C), const2d),                    # bu
        ],
        out_specs=pl.BlockSpec((tm, C), lambda i: (i, 0)),
    )

    out2 = pl.pallas_call(
        adapter_kernel,
        out_shape=jax.ShapeDtypeStruct((rows, C), jnp.float32),
        grid_spec=grid_spec,
        compiler_params=pltpu.CompilerParams(
            dimension_semantics=("parallel",)),
    )(x2, params["wd"], params["bd"], params["wu"], params["bu"])

    return out2.reshape(B, N, C)


# --------------------------- pure-JAX reference ------------------------------
def reference(x, p):
    down = jnp.maximum(x @ p["wd"] + p["bd"][0], 0.0)
    up = (down @ p["wu"] + p["bu"][0]) * SCALE
    return up + x


# --------------------------------- main ---------------------------------------
if __name__ == "__main__":
    key = jax.random.PRNGKey(0)
    keys = jax.random.split(key, 6)

    B, N, C, R = 2, 16, D_MODEL, BOTTLENECK

    # Deterministic synthetic parameters. (The module's lora init would zero
    # the up_proj, making the forward trivially x; random weights exercise the
    # full datapath while keeping identical forward semantics.)
    params = {
        "wd": 0.05 * jax.random.normal(keys[0], (C, R), jnp.float32),
        "bd": 0.01 * jax.random.normal(keys[1], (1, R), jnp.float32),
        "wu": 0.05 * jax.random.normal(keys[2], (R, C), jnp.float32),
        "bu": 0.01 * jax.random.normal(keys[3], (1, C), jnp.float32),
    }

    x = jax.random.normal(keys[4], (B, N, C), jnp.float32)

    out = adapter_forward(x, params)
    out = jax.block_until_ready(out)

    ref = reference(x, params)
    assert out.shape == (B, N, C)
    assert jnp.allclose(out, ref, atol=1e-5, rtol=1e-5), \
        f"max err {jnp.max(jnp.abs(out - ref))}"

    print("KERNEL_OK")
</pallas_src>

<mosaic_0001>
module attributes {stable_mosaic.version = 11 : i64} {
  func.func @adapter_kernel(%arg0: i32, %arg1: memref<16x128xf32, #tpu.memory_space<vmem>>, %arg2: memref<128x64xf32, #tpu.memory_space<vmem>>, %arg3: memref<1x64xf32, #tpu.memory_space<vmem>>, %arg4: memref<64x128xf32, #tpu.memory_space<vmem>>, %arg5: memref<1x128xf32, #tpu.memory_space<vmem>>, %arg6: memref<16x128xf32, #tpu.memory_space<vmem>>) attributes {dimension_semantics = [#tpu.dimension_semantics<parallel>], iteration_bounds = array<i64: 2>, scalar_prefetch = 0 : i64, scratch_operands = 0 : i64, tpu.core_type = #tpu.core_type<tc>, window_params = [{transform_indices = @transform_0, window_bounds = array<i64: 16, 128>}, {pipeline_mode = #tpu.pipeline_mode<synchronous>, transform_indices = @transform_1, window_bounds = array<i64: 128, 64>}, {pipeline_mode = #tpu.pipeline_mode<synchronous>, transform_indices = @transform_2, window_bounds = array<i64: 1, 64>}, {pipeline_mode = #tpu.pipeline_mode<synchronous>, transform_indices = @transform_3, window_bounds = array<i64: 64, 128>}, {pipeline_mode = #tpu.pipeline_mode<synchronous>, transform_indices = @transform_4, window_bounds = array<i64: 1, 128>}, {transform_indices = @transform_5, window_bounds = array<i64: 16, 128>}]} {
    %c0 = arith.constant 0 : index
    %c0_0 = arith.constant 0 : index
    %0 = vector.load %arg1[%c0, %c0_0] : memref<16x128xf32, #tpu.memory_space<vmem>>, vector<16x128xf32>
    %c0_1 = arith.constant 0 : index
    %c0_2 = arith.constant 0 : index
    %1 = vector.load %arg2[%c0_1, %c0_2] : memref<128x64xf32, #tpu.memory_space<vmem>>, vector<128x64xf32>
    %cst = arith.constant dense<0.000000e+00> : vector<16x64xf32>
    %2 = tpu.matmul %0, %1, %cst {dimension_numbers = #tpu.dot_dimension_numbers<[1], [0], [0], [1], [0, 0, 1, 1], [], []>} : vector<16x128xf32>, vector<128x64xf32>, vector<16x64xf32> -> vector<16x64xf32>
    %c0_3 = arith.constant 0 : index
    %c0_4 = arith.constant 0 : index
    %3 = vector.load %arg3[%c0_3, %c0_4] : memref<1x64xf32, #tpu.memory_space<vmem>>, vector<1x64xf32>
    %4 = vector.broadcast %3 : vector<1x64xf32> to vector<16x64xf32>
    %5 = arith.addf %2, %4 : vector<16x64xf32>
    %cst_5 = arith.constant 0.000000e+00 : f32
    %6 = vector.broadcast %cst_5 : f32 to vector<16x64xf32>
    %7 = arith.maximumf %5, %6 : vector<16x64xf32>
    %c0_6 = arith.constant 0 : index
    %c0_7 = arith.constant 0 : index
    %8 = vector.load %arg4[%c0_6, %c0_7] : memref<64x128xf32, #tpu.memory_space<vmem>>, vector<64x128xf32>
    %cst_8 = arith.constant dense<0.000000e+00> : vector<16x128xf32>
    %9 = tpu.matmul %7, %8, %cst_8 {dimension_numbers = #tpu.dot_dimension_numbers<[1], [0], [0], [1], [0, 0, 1, 1], [], []>} : vector<16x64xf32>, vector<64x128xf32>, vector<16x128xf32> -> vector<16x128xf32>
    %c0_9 = arith.constant 0 : index
    %c0_10 = arith.constant 0 : index
    %10 = vector.load %arg5[%c0_9, %c0_10] : memref<1x128xf32, #tpu.memory_space<vmem>>, vector<1x128xf32>
    %11 = vector.broadcast %10 : vector<1x128xf32> to vector<16x128xf32>
    %12 = arith.addf %9, %11 : vector<16x128xf32>
    %cst_11 = arith.constant 1.000000e-01 : f32
    %13 = vector.broadcast %cst_11 : f32 to vector<16x128xf32>
    %14 = arith.mulf %12, %13 : vector<16x128xf32>
    %15 = arith.addf %14, %0 : vector<16x128xf32>
    %c0_12 = arith.constant 0 : index
    %c0_13 = arith.constant 0 : index
    %16 = vector.load %arg6[%c0_12, %c0_13] : memref<16x128xf32, #tpu.memory_space<vmem>>, vector<16x128xf32>
    tpu.vector_store %arg6[%c0_12, %c0_13], %15 {strides = array<i32>} : memref<16x128xf32, #tpu.memory_space<vmem>>, vector<16x128xf32>,
    return
  }
  func.func @transform_0(%arg0: i32) -> (i32, i32) {
    %c0_i32 = arith.constant 0 : i32
    %c0_i32_0 = arith.constant 0 : i32
    return %arg0, %c0_i32 : i32, i32
  }
  func.func @transform_1(%arg0: i32) -> (i32, i32) {
    %c0_i32 = arith.constant 0 : i32
    %c0_i32_0 = arith.constant 0 : i32
    %c0_i32_1 = arith.constant 0 : i32
    return %c0_i32, %c0_i32_0 : i32, i32
  }
  func.func @transform_2(%arg0: i32) -> (i32, i32) {
    %c0_i32 = arith.constant 0 : i32
    %c0_i32_0 = arith.constant 0 : i32
    %c0_i32_1 = arith.constant 0 : i32
    return %c0_i32, %c0_i32_0 : i32, i32
  }
  func.func @transform_3(%arg0: i32) -> (i32, i32) {
    %c0_i32 = arith.constant 0 : i32
    %c0_i32_0 = arith.constant 0 : i32
    %c0_i32_1 = arith.constant 0 : i32
    return %c0_i32, %c0_i32_0 : i32, i32
  }
  func.func @transform_4(%arg0: i32) -> (i32, i32) {
    %c0_i32 = arith.constant 0 : i32
    %c0_i32_0 = arith.constant 0 : i32
    %c0_i32_1 = arith.constant 0 : i32
    return %c0_i32, %c0_i32_0 : i32, i32
  }
  func.func @transform_5(%arg0: i32) -> (i32, i32) {
    %c0_i32 = arith.constant 0 : i32
    %c0_i32_0 = arith.constant 0 : i32
    return %arg0, %c0_i32 : i32, i32
  }
}

</mosaic_0001>

<llo_original>
// kernel: adapter_forward.1
$region0: #{adapter_forward.1}
  #allocation0 [shape = 'u32[]', space=smem, size = 0x4, offset = 0x4, fixed_abs, tag = 'smem constant byte address 0x4 - core index']
  #allocation1 [shape = 'u32[144,128]{1,0:T(1,128)}', space=vmem, size = 0x12000, scoped, tag = 'internal scratch']
  %s0 = inlined_call_operand.vmem [shape: f32[32,128], index: 0, kind: input, shape index: {}]
  %s1 = inlined_call_operand.vmem [shape: f32[128,64], index: 1, kind: input, shape index: {}]
  %s2 = inlined_call_operand.vmem [shape: f32[1,64], index: 2, kind: input, shape index: {}]
  %s3 = inlined_call_operand.vmem [shape: f32[64,128], index: 3, kind: input, shape index: {}]
  %s4 = inlined_call_operand.vmem [shape: f32[1,128], index: 4, kind: input, shape index: {}]
  %s5 = inlined_call_operand.hbm [shape: f32[32,128], index: 5, kind: output, shape index: {}]
  %s6 = sld [smem:[#allocation0]]
  $region53: #{adapter_forward.1} parent=0
    _
  %s8 = ssub.s32 1, %s6
  %s9 = scalar_select 0, %s8, %s6
  $region1: #{adapter_forward.1} parent=0
    #allocation2 [shape = 'u8[16384]{0}', space=vmem, size = 0x4000, scoped, tag = 'output window, operand 0']
    #allocation3 [shape = 's32[2]{0}', space=sflag, size = 0x8, scoped, tag = 'scoped memory for adapter_forward.1']
    %10 = vsyncpa [#allocation3], 0
    %s11 = scalar_lea.sflag [#allocation3], 1
    %12 = vsyncpa %s11, 0
    loop: start=0, step=1, limit=4
    $region2: #{adapter_forward.1} parent=1 // loop_pre_header
      _
    $region3: #{adapter_forward.1} parent=1 // loop_header
      %s14 = sphi 0, %s18
      %p15 = scmp.ge.s32.totalorder %s14, 4
      %s24 = sphi 0, %s26
      %s27 = sphi 0, %s24
      %s28 = sphi 0, %s27
      %s44 = sphi 0, %s28
      %s48 = sphi 0, %s48
      %s50 = sphi 0, %s48
      %s51 = sphi 0, %s50
      %s65 = sphi 0, %s51
      %s69 = sphi 0, %s69
      %s71 = sphi 0, %s69
      %s72 = sphi 0, %s71
      %s86 = sphi 0, %s72
      %s90 = sphi 0, %s90
      %s92 = sphi 0, %s90
      %s93 = sphi 0, %s92
      %s107 = sphi 0, %s93
      %s111 = sphi 0, %s111
      %s113 = sphi 0, %s111
      %s114 = sphi 0, %s113
      %s128 = sphi 0, %s114
      %s134 = sphi 0, %s136
      %s137 = sphi 0, %s134
      %s138 = sphi 0, %s137
      %s154 = sphi 0, %s138
    $region4: #{adapter_forward.1} parent=1 // loop_header_branch
      %17 = sbr.rel (%p15) target = $region8
    $region5: #{adapter_forward.1} parent=1 // loop_body
      %s19 = ssub.s32 %s14, 1
      %s20 = ssub.s32 %s14, 2
      %s21 = sadd.s32 %s14, 1
      %s22 = ssub.s32 %s14, %s21
      %p23 = scmp.eq.s32.totalorder %s22, 0
      %s25 = sadd.s32 %s24, 1
      %s26 = scalar_select %p23, %s24, %s25
      %p29 = pneg %p23
      %p30 = scmp.eq.s32.totalorder %s14, 1
      %p31 = por %p29, %p30
      %p32 = scmp.ne.s32.totalorder %s24, %s27
      %p33 = scmp.eq.s32.totalorder %s14, 0
      %p34 = por %p32, %p33
      %p35 = scmp.ne.s32.totalorder %s24, %s27
      %p36 = scmp.eq.s32.totalorder %s19, 1
      %p37 = por %p35, %p36
      %p38 = scmp.ne.s32.totalorder %s27, %s28
      %p39 = scmp.eq.s32.totalorder %s19, 0
      %p40 = por %p38, %p39
      %p41 = scmp.ne.s32.totalorder %s27, %s28
      %p42 = scmp.eq.s32.totalorder %s20, 1
      %p43 = por %p41, %p42
      %p45 = scmp.ne.s32.totalorder %s28, %s44
      %p46 = scmp.eq.s32.totalorder %s20, 0
      %p47 = por %p45, %p46
      %s49 = sadd.s32 %s48, 1
      %p52 = scmp.eq.s32.totalorder %s14, 1
      %p53 = scmp.ne.s32.totalorder %s48, %s50
      %p54 = scmp.eq.s32.totalorder %s14, 0
      %p55 = por %p53, %p54
      %p56 = scmp.ne.s32.totalorder %s48, %s50
      %p57 = scmp.eq.s32.totalorder %s19, 1
      %p58 = por %p56, %p57
      %p59 = scmp.ne.s32.totalorder %s50, %s51
      %p60 = scmp.eq.s32.totalorder %s19, 0
      %p61 = por %p59, %p60
      %p62 = scmp.ne.s32.totalorder %s50, %s51
      %p63 = scmp.eq.s32.totalorder %s20, 1
      %p64 = por %p62, %p63
      %p66 = scmp.ne.s32.totalorder %s51, %s65
      %p67 = scmp.eq.s32.totalorder %s20, 0
      %p68 = por %p66, %p67
      %s70 = sadd.s32 %s69, 1
      %p73 = scmp.eq.s32.totalorder %s14, 1
      %p74 = scmp.ne.s32.totalorder %s69, %s71
      %p75 = scmp.eq.s32.totalorder %s14, 0
      %p76 = por %p74, %p75
      %p77 = scmp.ne.s32.totalorder %s69, %s71
      %p78 = scmp.eq.s32.totalorder %s19, 1
      %p79 = por %p77, %p78
      %p80 = scmp.ne.s32.totalorder %s71, %s72
      %p81 = scmp.eq.s32.totalorder %s19, 0
      %p82 = por %p80, %p81
      %p83 = scmp.ne.s32.totalorder %s71, %s72
      %p84 = scmp.eq.s32.totalorder %s20, 1
      %p85 = por %p83, %p84
      %p87 = scmp.ne.s32.totalorder %s72, %s86
      %p88 = scmp.eq.s32.totalorder %s20, 0
      %p89 = por %p87, %p88
      %s91 = sadd.s32 %s90, 1
      %p94 = scmp.eq.s32.totalorder %s14, 1
      %p95 = scmp.ne.s32.totalorder %s90, %s92
      %p96 = scmp.eq.s32.totalorder %s14, 0
      %p97 = por %p95, %p96
      %p98 = scmp.ne.s32.totalorder %s90, %s92
      %p99 = scmp.eq.s32.totalorder %s19, 1
      %p100 = por %p98, %p99
      %p101 = scmp.ne.s32.totalorder %s92, %s93
      %p102 = scmp.eq.s32.totalorder %s19, 0
      %p103 = por %p101, %p102
      %p104 = scmp.ne.s32.totalorder %s92, %s93
      %p105 = scmp.eq.s32.totalorder %s20, 1
      %p106 = por %p104, %p105
      %p108 = scmp.ne.s32.totalorder %s93, %s107
      %p109 = scmp.eq.s32.totalorder %s20, 0
      %p110 = por %p108, %p109
      %s112 = sadd.s32 %s111, 1
      %p115 = scmp.eq.s32.totalorder %s14, 1
      %p116 = scmp.ne.s32.totalorder %s111, %s113
      %p117 = scmp.eq.s32.totalorder %s14, 0
      %p118 = por %p116, %p117
      %p119 = scmp.ne.s32.totalorder %s111, %s113
      %p120 = scmp.eq.s32.totalorder %s19, 1
      %p121 = por %p119, %p120
      %p122 = scmp.ne.s32.totalorder %s113, %s114
      %p123 = scmp.eq.s32.totalorder %s19, 0
      %p124 = por %p122, %p123
      %p125 = scmp.ne.s32.totalorder %s113, %s114
      %p126 = scmp.eq.s32.totalorder %s20, 1
      %p127 = por %p125, %p126
      %p129 = scmp.ne.s32.totalorder %s114, %s128
      %p130 = scmp.eq.s32.totalorder %s20, 0
      %p131 = por %p129, %p130
      %s132 = ssub.s32 %s14, %s21
      %p133 = scmp.eq.s32.totalorder %s132, 0
      %s135 = sadd.s32 %s134, 1
      %s136 = scalar_select %p133, %s134, %s135
      %p139 = pneg %p133
      %p140 = scmp.eq.s32.totalorder %s14, 1
      %p141 = por %p139, %p140
      %p142 = scmp.ne.s32.totalorder %s134, %s137
      %p143 = scmp.eq.s32.totalorder %s14, 0
      %p144 = por %p142, %p143
      %p145 = scmp.ne.s32.totalorder %s134, %s137
      %p146 = scmp.eq.s32.totalorder %s19, 1
      %p147 = por %p145, %p146
      %p148 = scmp.ne.s32.totalorder %s137, %s138
      %p149 = scmp.eq.s32.totalorder %s19, 0
      %p150 = por %p148, %p149
      %p151 = scmp.ne.s32.totalorder %s137, %s138
      %p152 = scmp.eq.s32.totalorder %s20, 1
      %p153 = por %p151, %p152
      %p155 = scmp.ne.s32.totalorder %s138, %s154
      %p156 = scmp.eq.s32.totalorder %s20, 0
      %p157 = por %p155, %p156
      %p158 = scmp.le.s32.totalorder 1, %s14
      %p159 = scmp.lt.s32.totalorder %s14, 3
      %p160 = pnand %p158, %p159
      %p161 = pneg %p160
      // Predicated region
      $region9: #{adapter_forward.1} parent=5 // pred_check
        _
      $region10: #{adapter_forward.1} parent=5 // pred_check_branch
        %163 = sbr.rel (%p160) target = $region12
      $region11: #{adapter_forward.1} parent=5 // pred_region
        %s164 = ssub.s32 %s14, 1
        // Predicated region
        $region13: #{adapter_forward.1} parent=11 // pred_check
          %p165 = pneg %p61
        $region14: #{adapter_forward.1} parent=11 // pred_check_branch
          %167 = sbr.rel (%p165) target = $region16
        $region15: #{adapter_forward.1} parent=11 // pred_region
          _
        $region16: #{adapter_forward.1} parent=11 // pred_fallthru
          _
        // Predicated region
        $region17: #{adapter_forward.1} parent=11 // pred_check
          %p168 = pneg %p82
        $region18: #{adapter_forward.1} parent=11 // pred_check_branch
          %170 = sbr.rel (%p168) target = $region20
        $region19: #{adapter_forward.1} parent=11 // pred_region
          _
        $region20: #{adapter_forward.1} parent=11 // pred_fallthru
          _
        // Predicated region
        $region21: #{adapter_forward.1} parent=11 // pred_check
          %p171 = pneg %p103
        $region22: #{adapter_forward.1} parent=11 // pred_check_branch
          %173 = sbr.rel (%p171) target = $region24
        $region23: #{adapter_forward.1} parent=11 // pred_region
          _
        $region24: #{adapter_forward.1} parent=11 // pred_fallthru
          _
        // Predicated region
        $region25: #{adapter_forward.1} parent=11 // pred_check
          %p174 = pneg %p124
        $region26: #{adapter_forward.1} parent=11 // pred_check_branch
          %176 = sbr.rel (%p174) target = $region28
        $region27: #{adapter_forward.1} parent=11 // pred_region
          _
        $region28: #{adapter_forward.1} parent=11 // pred_fallthru
          _
      $region12: #{adapter_forward.1} parent=5 // pred_fallthru
        _
      %p177 = scmp.lt.s32.totalorder %s14, 2
      // Predicated region
      $region29: #{adapter_forward.1} parent=5 // pred_check
        %p178 = pneg %p177
      $region30: #{adapter_forward.1} parent=5 // pred_check_branch
        %180 = sbr.rel (%p178) target = $region32
      $region31: #{adapter_forward.1} parent=5 // pred_region
        // Predicated region
        $region33: #{adapter_forward.1} parent=31 // pred_check
          %p181 = pneg %p34
        $region34: #{adapter_forward.1} parent=31 // pred_check_branch
          %183 = sbr.rel (%p181) target = $region36
        $region35: #{adapter_forward.1} parent=31 // pred_region
          %s184 = smul.u32 2, %s14
          %p185 = scmp.lt.s32.totalorder %s184, 3
          %s186 = scalar_select %p185, %s184, 3
          %s187 = smul.addr %s186, 8
          %s188 = scalar_lea.vmem %s0, %s187
          %s189 = smul.u32 2, %s14
        $region36: #{adapter_forward.1} parent=31 // pred_fallthru
          _
      $region32: #{adapter_forward.1} parent=5 // pred_fallthru
        _
      %p190 = scmp.le.s32.totalorder 1, %s14
      %p191 = scmp.lt.s32.totalorder %s14, 3
      %p192 = pnand %p190, %p191
      %p193 = pneg %p192
      // Predicated region
      $region37: #{adapter_forward.1} parent=5 // pred_check
        _
      $region38: #{adapter_forward.1} parent=5 // pred_check_branch
        %195 = sbr.rel (%p192) target = $region40
      $region39: #{adapter_forward.1} parent=5 // pred_region
        %s196 = ssub.s32 %s14, 1
        %s197 = smul.u32 2, %s19
        %p198 = scmp.lt.s32.totalorder %s197, 3
        %s199 = scalar_select %p198, %s197, 3
        %s200 = smul.addr %s199, 8
        %s201 = scalar_lea.vmem %s0, %s200
        %p202 = pneg %p40
        %p203 = pneg %p37
        %p204 = pneg %p61
        %p205 = pneg %p58
        %p206 = pneg %p82
        %p207 = pneg %p79
        %p208 = pneg %p103
        %p209 = pneg %p100
        %p210 = pneg %p124
        %p211 = pneg %p121
        %p212 = pneg %p150
        %p213 = pneg %p147
        %s214 = sand.u32 %s137, 1
        %s215 = scalar_lea.sflag [#allocation3], %s214
        %s216 = sand.u32 %s137, 1
        %s217 = smul.addr %s216, 16
        %s218 = scalar_lea.vmem [#allocation2], %s217
        %s219 = smul.u32 2, %s19
        %p220 = scmp.lt.s32.totalorder %s219, 3
        %s221 = scalar_select %p220, %s219, 3
        %s222 = smul.addr %s221, 8
        %s223 = scalar_lea.vmem %s0, %s222
        %s224 = smul.u32 2, %s19
        %s225 = smul.u32 2, %s19
        %v226 = vld [vmem:[%s223] sm:$0xff]
        %v227 = vld [vmem:[%s223 + $0x8] sm:$0xff]
        %v228 = vld [vmem:[%s1] sm:$0xff]
        %v229 = vld [vmem:[%s1 + $0x8] sm:$0xff]
        %v230 = vld [vmem:[%s1 + $0x10] sm:$0xff]
        %v231 = vld [vmem:[%s1 + $0x18] sm:$0xff]
        %v232 = vld [vmem:[%s1 + $0x20] sm:$0xff]
        %v233 = vld [vmem:[%s1 + $0x28] sm:$0xff]
        %v234 = vld [vmem:[%s1 + $0x30] sm:$0xff]
        %v235 = vld [vmem:[%s1 + $0x38] sm:$0xff]
        %v236 = vld [vmem:[%s1 + $0x40] sm:$0xff]
        %v237 = vld [vmem:[%s1 + $0x48] sm:$0xff]
        %v238 = vld [vmem:[%s1 + $0x50] sm:$0xff]
        %v239 = vld [vmem:[%s1 + $0x58] sm:$0xff]
        %v240 = vld [vmem:[%s1 + $0x60] sm:$0xff]
        %v241 = vld [vmem:[%s1 + $0x68] sm:$0xff]
        %v242 = vld [vmem:[%s1 + $0x70] sm:$0xff]
        %v243 = vld [vmem:[%s1 + $0x78] sm:$0xff]
        %v244 = vld [vmem:[%s2] sm:$0x1]
        %v246 = vlaneseq
        %v247 = vshrl.u32 %v246, 7
        %v248 = vsub.s32 0, %v247
        %v249 = vrot.slane %v244, %v248
        %251 = vmatprep.subr.mxu0 0.0
        %252 = vmatpush1.msra.mxu0 %v228
        %253 = vmatprep.subr.mxu0 0.0
        %254 = vmatpush1.msra.mxu0 %v229
        %255 = vmatprep.subr.mxu0 0.0
        %256 = vmatpush1.msra.mxu0 %v230
        %257 = vmatprep.subr.mxu0 0.0
        %258 = vmatpush1.msra.mxu0 %v231
        %259 = vmatprep.subr.mxu0 0.0
        %260 = vmatpush1.msra.mxu0 %v232
        %261 = vmatprep.subr.mxu0 0.0
        %262 = vmatpush1.msra.mxu0 %v233
        %263 = vmatprep.subr.mxu0 0.0
        %264 = vmatpush1.msra.mxu0 %v234
        %265 = vmatprep.subr.mxu0 0.0
        %266 = vmatpush1.msra.mxu0 %v235
        %267 = vmatprep.subr.mxu0 0.0
        %268 = vmatpush1.msra.mxu0 %v236
        %269 = vmatprep.subr.mxu0 0.0
        %270 = vmatpush1.msra.mxu0 %v237
        %271 = vmatprep.subr.mxu0 0.0
        %272 = vmatpush1.msra.mxu0 %v238
        %273 = vmatprep.subr.mxu0 0.0
        %274 = vmatpush1.msra.mxu0 %v239
        %275 = vmatprep.subr.mxu0 0.0
        %276 = vmatpush1.msra.mxu0 %v240
        %277 = vmatprep.subr.mxu0 0.0
        %278 = vmatpush1.msra.mxu0 %v241
        %279 = vmatprep.subr.mxu0 0.0
        %280 = vmatpush1.msra.mxu0 %v242
        %281 = vmatprep.subr.mxu0 0.0
        %282 = vmatpush1.msra.mxu0 %v243
        %283 = vmatprep.subr.mxu0 0.0
        %284 = vmatpush1.msra.mxu0 0.0
        %285 = vmatprep.subr.mxu0 0.0
        %286 = vmatpush1.msra.mxu0 0.0
        %287 = vmatprep.subr.mxu0 0.0
        %288 = vmatpush1.msra.mxu0 0.0
        %289 = vmatprep.subr.mxu0 0.0
        %290 = vmatpush1.msra.mxu0 0.0
        %291 = vmatprep.subr.mxu0 0.0
        %292 = vmatpush1.msra.mxu0 0.0
        %293 = vmatprep.subr.mxu0 0.0
        %294 = vmatpush1.msra.mxu0 0.0
        %295 = vmatprep.subr.mxu0 0.0
        %296 = vmatpush1.msra.mxu0 0.0
        %297 = vmatprep.subr.mxu0 0.0
        %298 = vmatpush1.msra.mxu0 0.0
        %299 = vmatprep.subr.mxu0 0.0
        %300 = vmatpush1.msra.mxu0 0.0
        %301 = vmatprep.subr.mxu0 0.0
        %302 = vmatpush1.msra.mxu0 0.0
        %303 = vmatprep.subr.mxu0 0.0
        %304 = vmatpush1.msra.mxu0 0.0
        %305 = vmatprep.subr.mxu0 0.0
        %306 = vmatpush1.msra.mxu0 0.0
        %307 = vmatprep.subr.mxu0 0.0
        %308 = vmatpush1.msra.mxu0 0.0
        %309 = vmatprep.subr.mxu0 0.0
        %310 = vmatpush1.msra.mxu0 0.0
        %311 = vmatprep.subr.mxu0 0.0
        %312 = vmatpush1.msra.mxu0 0.0
        %313 = vmatprep.subr.mxu0 0.0
        %314 = vmatpush1.msra.mxu0 0.0
        %315 = vmatprep.mubr.f32.mxu0 0.0
        %316 = vmatmul.mubr.f32.gmra.mrb[0].mxu0 %v226
        %v317 = vpop.f32.mrb[0].mxu0
        %v318 = vadd.f32 %v249, %v317
        %v319 = vpop.f32.mrb[0].mxu0
        %320 = vmatprep.mubr.f32.mxu0 0.0
        %321 = vmatmul.mubr.f32.gmra.mrb[0].mxu0 %v227
        %v322 = vpop.f32.mrb[0].mxu0
        %v323 = vadd.f32 %v249, %v322
        %v324 = vpop.f32.mrb[0].mxu0
        %325 = vdwg.mxu0
        %v326 = vmax.f32 %v318, 0.0
        %v327 = vmax.f32 %v323, 0.0
        %v328 = vld [vmem:[%s3] sm:$0xff]
        %v329 = vld [vmem:[%s3 + $0x8] sm:$0xff]
        %v330 = vld [vmem:[%s3 + $0x10] sm:$0xff]
        %v331 = vld [vmem:[%s3 + $0x18] sm:$0xff]
        %v332 = vld [vmem:[%s3 + $0x20] sm:$0xff]
        %v333 = vld [vmem:[%s3 + $0x28] sm:$0xff]
        %v334 = vld [vmem:[%s3 + $0x30] sm:$0xff]
        %v335 = vld [vmem:[%s3 + $0x38] sm:$0xff]
        %v336 = vld [vmem:[%s4] sm:$0x1]
        %v338 = vlaneseq
        %v339 = vshrl.u32 %v338, 7
        %v340 = vsub.s32 0, %v339
        %v341 = vrot.slane %v336, %v340
        %vm343 = vcmask 523264
        %v345 = vsel %vm343, %v326, 0
        %v348 = vsel %vm343, %v327, 0
        %350 = vmatprep.subr.mxu0 0.0
        %351 = vmatpush1.msra.mxu0 %v328
        %352 = vmatprep.subr.mxu0 0.0
        %353 = vmatpush1.msra.mxu0 %v329
        %354 = vmatprep.subr.mxu0 0.0
        %355 = vmatpush1.msra.mxu0 %v330
        %356 = vmatprep.subr.mxu0 0.0
        %357 = vmatpush1.msra.mxu0 %v331
        %358 = vmatprep.subr.mxu0 0.0
        %359 = vmatpush1.msra.mxu0 %v332
        %360 = vmatprep.subr.mxu0 0.0
        %361 = vmatpush1.msra.mxu0 %v333
        %362 = vmatprep.subr.mxu0 0.0
        %363 = vmatpush1.msra.mxu0 %v334
        %364 = vmatprep.subr.mxu0 0.0
        %365 = vmatpush1.msra.mxu0 %v335
        %366 = vmatprep.subr.mxu0 0.0
        %367 = vmatpush1.msra.mxu0 0.0
        %368 = vmatprep.subr.mxu0 0.0
        %369 = vmatpush1.msra.mxu0 0.0
        %370 = vmatprep.subr.mxu0 0.0
        %371 = vmatpush1.msra.mxu0 0.0
        %372 = vmatprep.subr.mxu0 0.0
        %373 = vmatpush1.msra.mxu0 0.0
        %374 = vmatprep.subr.mxu0 0.0
        %375 = vmatpush1.msra.mxu0 0.0
        %376 = vmatprep.subr.mxu0 0.0
        %377 = vmatpush1.msra.mxu0 0.0
        %378 = vmatprep.subr.mxu0 0.0
        %379 = vmatpush1.msra.mxu0 0.0
        %380 = vmatprep.subr.mxu0 0.0
        %381 = vmatpush1.msra.mxu0 0.0
        %382 = vmatprep.subr.mxu0 0.0
        %383 = vmatpush1.msra.mxu0 0.0
        %384 = vmatprep.subr.mxu0 0.0
        %385 = vmatpush1.msra.mxu0 0.0
        %386 = vmatprep.subr.mxu0 0.0
        %387 = vmatpush1.msra.mxu0 0.0
        %388 = vmatprep.subr.mxu0 0.0
        %389 = vmatpush1.msra.mxu0 0.0
        %390 = vmatprep.subr.mxu0 0.0
        %391 = vmatpush1.msra.mxu0 0.0
        %392 = vmatprep.subr.mxu0 0.0
        %393 = vmatpush1.msra.mxu0 0.0
        %394 = vmatprep.subr.mxu0 0.0
        %395 = vmatpush1.msra.mxu0 0.0
        %396 = vmatprep.subr.mxu0 0.0
        %397 = vmatpush1.msra.mxu0 0.0
        %398 = vmatprep.subr.mxu0 0.0
        %399 = vmatpush1.msra.mxu0 0.0
        %400 = vmatprep.subr.mxu0 0.0
        %401 = vmatpush1.msra.mxu0 0.0
        %402 = vmatprep.subr.mxu0 0.0
        %403 = vmatpush1.msra.mxu0 0.0
        %404 = vmatprep.subr.mxu0 0.0
        %405 = vmatpush1.msra.mxu0 0.0
        %406 = vmatprep.subr.mxu0 0.0
        %407 = vmatpush1.msra.mxu0 0.0
        %408 = vmatprep.subr.mxu0 0.0
        %409 = vmatpush1.msra.mxu0 0.0
        %410 = vmatprep.subr.mxu0 0.0
        %411 = vmatpush1.msra.mxu0 0.0
        %412 = vmatprep.subr.mxu0 0.0
        %413 = vmatpush1.msra.mxu0 0.0
        %414 = vmatprep.mubr.f32.mxu0 0.0
        %415 = vmatmul.mubr.f32.gmra.mrb[0].mxu0 %v345
        %v416 = vpop.f32.mrb[0].mxu0
        %v417 = vadd.f32 %v341, %v416
        %v418 = vpop.f32.mrb[0].mxu0
        %419 = vmatprep.mubr.f32.mxu0 0.0
        %420 = vmatmul.mubr.f32.gmra.mrb[0].mxu0 %v348
        %v421 = vpop.f32.mrb[0].mxu0
        %v422 = vadd.f32 %v341, %v421
        %v423 = vpop.f32.mrb[0].mxu0
        %424 = vdwg.mxu0
        %v425 = vmul.f32 %v417, 0.1
        %v426 = vmul.f32 %v422, 0.1
        %v427 = vadd.f32 %v425, %v226
        %v428 = vadd.f32 %v426, %v227
        %429 = vst [vmem:[%s218] sm:$0xff] %v427
        %430 = vst [vmem:[%s218 + $0x8] sm:$0xff] %v428
        %s431 = sand.u32 %s137, 1
        %s432 = scalar_lea.sflag [#allocation3], %s431
        %s433 = sand.u32 %s137, 1
        %s434 = smul.addr %s433, 16
        %s435 = scalar_lea.vmem [#allocation2], %s434
        // Predicated region
        $region41: #{adapter_forward.1} parent=39 // pred_check
          %p436 = pneg %p147
        $region42: #{adapter_forward.1} parent=39 // pred_check_branch
          %438 = sbr.rel (%p436) target = $region44
        $region43: #{adapter_forward.1} parent=39 // pred_region
          %s439 = smul.u32 2, %s19
          %s441 = ssub.s32 256, 256
          %442 = vsyncadd %s432, %s441
          %s443 = smul.addr %s439, 128
          %s444 = scalar_lea.hbm %s5, %s443
          %s445 = sshll.u32 %s435, 4
          %s446 = int_to_ptr.vmem [resolvable:$true] %s445
          %451 = dma.vmem_to_hbm [thread:$0]  %s446, 256, %s444, %s432, 128, 128, 8
        $region44: #{adapter_forward.1} parent=39 // pred_fallthru
          _
      $region40: #{adapter_forward.1} parent=5 // pred_fallthru
        _
      %p452 = scmp.le.s32.totalorder 2, %s14
      // Predicated region
      $region45: #{adapter_forward.1} parent=5 // pred_check
        %p453 = pneg %p452
      $region46: #{adapter_forward.1} parent=5 // pred_check_branch
        %455 = sbr.rel (%p453) target = $region48
      $region47: #{adapter_forward.1} parent=5 // pred_region
        %s456 = ssub.s32 %s14, 2
        // Predicated region
        $region49: #{adapter_forward.1} parent=47 // pred_check
          %p457 = pneg %p153
        $region50: #{adapter_forward.1} parent=47 // pred_check_branch
          %459 = sbr.rel (%p457) target = $region52
        $region51: #{adapter_forward.1} parent=47 // pred_region
          %s460 = sand.u32 %s138, 1
          %s461 = scalar_lea.sflag [#allocation3], %s460
          %s462 = sand.u32 %s138, 1
          %s463 = smul.addr %s462, 16
          %s464 = scalar_lea.vmem [#allocation2], %s463
          %465 = dma.done %s461, 256
        $region52: #{adapter_forward.1} parent=47 // pred_fallthru
          _
      $region48: #{adapter_forward.1} parent=5 // pred_fallthru
        _
    $region6: #{adapter_forward.1} parent=1 // loop_footer
      %s18 = sadd.s32 1, %s14
    $region7: #{adapter_forward.1} parent=1 // loop_footer_branch
      %13 = sbr.rel target = $region3
    $region8: #{adapter_forward.1} parent=1 // loop_exit
      _
    %466 = vsyncpa [#allocation3], 1
    %s467 = scalar_lea.sflag [#allocation3], 1
    %468 = vsyncpa %s467, 1

</llo_original>
